<compile_context>
chip_gen: v7x
topology: tpu7x:2x2x1
jax: 0.10.0
libtpu: 0.0.40
codegen_flags: <defaults>
</compile_context>

<pallas_src>
import functools

import jax
import jax.numpy as jnp
from jax.experimental import pallas as pl
from jax.experimental.pallas import tpu as pltpu


def _ca_fused_kernel(x_ref, w1t_ref, b1_ref, w2_ref, b2_ref, o_ref, *, inv_s):
    # x_ref : (Bn, C, S)   Bn batch items; channels on sublanes, spatial on lanes
    # w1t_ref: (C, Csq)    first 1x1x1 conv weight, transposed (in-ch on sublanes)
    # b1_ref : (1, Csq)
    # w2_ref : (C, Csq)    second 1x1x1 conv weight in (out-ch, in-ch) order
    # b2_ref : (C, 1)
    # o_ref : (Bn, C, S)
    # Global average pool over the flattened spatial (lane) axis, f32 accumulate.
    mean = jnp.sum(x_ref[...].astype(jnp.float32), axis=2, keepdims=True) * inv_s  # (Bn,C,1)

    # Squeeze: y[b,h] = sum_c w1[h,c]*mean[b,c] + b1[h]   (sublane reduction)
    y = jnp.sum(w1t_ref[...][None] * mean, axis=1, keepdims=True) + b1_ref[...][None]  # (Bn,1,Csq)
    y = y * jax.lax.logistic(y)                                                        # SiLU (EUP)

    # Excite: z[b,c] = sum_h w2[c,h]*y[b,h] + b2[c]       (lane reduction)
    z = jnp.sum(w2_ref[...][None] * y, axis=2, keepdims=True) + b2_ref[...][None]      # (Bn,C,1)
    scale = jax.lax.logistic(z)                                                        # Sigmoid

    # Rescale: re-read x from VMEM (spare vld slots) and store in native dtype.
    o_ref[...] = x_ref[...] * scale.astype(o_ref.dtype)


def _ca_tiled_kernel(x_ref, w1t_ref, b1_ref, w2_ref, b2_ref, o_ref,
                     sum_ref, scale_ref, *, n_tiles, inv_s):
    # Two-phase path for volumes whose (C,S) block does not fit VMEM.
    # grid = (N, 2*n_tiles):  k < n_tiles  -> accumulate per-channel sums
    #                         k >= n_tiles -> MLP once, then stream scaled tiles
    # x_ref/o_ref : (C, ts)   (batch dim squeezed)
    k = pl.program_id(1)

    @pl.when(k == 0)
    def _():
        sum_ref[...] = jnp.zeros_like(sum_ref)

    @pl.when(k < n_tiles)
    def _():
        sum_ref[...] += jnp.sum(x_ref[...].astype(jnp.float32), axis=1, keepdims=True)

    @pl.when(k == n_tiles)
    def _():
        mean = sum_ref[...] * inv_s                                           # (C,1)
        y = jnp.sum(w1t_ref[...] * mean, axis=0, keepdims=True) + b1_ref[...]  # (1,Csq)
        y = y * jax.lax.logistic(y)                                            # SiLU
        z = jnp.sum(w2_ref[...] * y, axis=1, keepdims=True) + b2_ref[...]      # (C,1)
        scale_ref[...] = jax.lax.logistic(z)                                   # Sigmoid

    @pl.when(k >= n_tiles)
    def _():
        o_ref[...] = x_ref[...] * scale_ref[...].astype(o_ref.dtype)


def _vmem_budget_bytes():
    # Generation-aware cap: v5e/v6e have 128 MiB physical VMEM, v7x has 64 MiB.
    try:
        cap = int(pltpu.get_tpu_info().vmem_capacity_bytes)
    except Exception:
        cap = 64 << 20  # most conservative (v7x)
    return (3 * cap) // 4


def _pick_spatial_tile(s, c, itemsize, budget):
    # Largest multiple-of-128 divisor of s whose double-buffered footprint fits.
    max_elems = max(128, budget // (4 * c * itemsize))
    ts, t = 0, 128
    while t <= s:
        if s % t == 0 and t <= max_elems:
            ts = t
        t += 128
    return ts  # 0 -> no valid lane-dense tile


def channel_attention_forward(x, w1, b1, w2, b2, *, force_spatial_tile=None):
    """out = x * Sigmoid(Conv1x1(SiLU(Conv1x1(AvgPool3d(x)))))   (NCDHW)."""
    n, c, d, h, w = x.shape
    s = d * h * w
    csq = w1.shape[0]

    # Contiguous reshapes only; x stays in its native dtype (no extra HBM pass).
    x2 = x.reshape(n, c, s)
    f32 = jnp.float32
    w1t = w1.reshape(csq, c).T.astype(f32)      # (C, Csq)
    b1r = b1.astype(f32).reshape(1, csq)
    b2r = b2.astype(f32).reshape(c, 1)
    w2m = w2.reshape(c, csq).astype(f32)        # (C, Csq)

    itemsize = x.dtype.itemsize
    item_bytes = c * s * itemsize
    weight_bytes = 4 * (2 * c * csq + csq + c)
    vmem_budget = _vmem_budget_bytes()

    out_shape = jax.ShapeDtypeStruct((n, c, s), x.dtype)
    inv_s = 1.0 / float(s)

    # Footprint of the fused path at its smallest block (one batch item):
    # double-buffered x + out, resident weights, headroom for compiler scratch.
    fused_min_need = 4 * item_bytes + 2 * weight_bytes + (1 << 20)
    want_tiled = (force_spatial_tile is not None) or (fused_min_need > vmem_budget)

    ts = 0
    if want_tiled:
        if force_spatial_tile is not None:
            ts = int(force_spatial_tile)
            if (s % ts) or (ts % 128):
                ts = 0
        else:
            ts = _pick_spatial_tile(s, c, itemsize, vmem_budget)

    if ts:
        # --- two-phase spatially tiled path (large volumes / forced for test) ---
        n_tiles = s // ts
        params = dict(dimension_semantics=("parallel", "arbitrary"))
        need = 4 * c * ts * itemsize + 2 * weight_bytes + (1 << 20)
        if need > (12 << 20):
            params["vmem_limit_bytes"] = int(min(need, vmem_budget))
        out = pl.pallas_call(
            functools.partial(_ca_tiled_kernel, n_tiles=n_tiles, inv_s=inv_s),
            out_shape=out_shape,
            grid=(n, 2 * n_tiles),
            in_specs=[
                # same spatial tiles are fetched in both phases
                pl.BlockSpec((None, c, ts), lambda i, k: (i, 0, k % n_tiles)),
                pl.BlockSpec((c, csq), lambda i, k: (0, 0)),
                pl.BlockSpec((1, csq), lambda i, k: (0, 0)),
                pl.BlockSpec((c, csq), lambda i, k: (0, 0)),
                pl.BlockSpec((c, 1), lambda i, k: (0, 0)),
            ],
            # phase 0 parks the out window on tile 0; it is only written (and
            # therefore only flushed with valid data) during phase 1.
            out_specs=pl.BlockSpec((None, c, ts),
                                   lambda i, k: (i, 0, jnp.maximum(k - n_tiles, 0))),
            scratch_shapes=[pltpu.VMEM((c, 1), jnp.float32),   # per-channel sums
                            pltpu.VMEM((c, 1), jnp.float32)],  # per-channel scale
            compiler_params=pltpu.CompilerParams(**params),
        )(x2, w1t, b1r, w2m, b2r)
        return out.reshape(n, c, d, h, w)

    # --- fused single-pass path ---
    # Pack batch items so each x block is ~1 MiB (amortizes per-step overhead)
    # while keeping >= 2 grid steps on the parallel axis when possible.
    target = 1 << 20
    bn = max(1, min(n, target // max(item_bytes, 1)))
    if n >= 2:
        bn = max(1, min(bn, n // 2))
    while n % bn:
        bn -= 1

    params = dict(dimension_semantics=("parallel",))
    need = 4 * bn * item_bytes + 2 * weight_bytes + (1 << 20)
    if need > (12 << 20):  # below every generation's default scoped VMEM (v5e: 16 MiB)
        params["vmem_limit_bytes"] = int(min(need, vmem_budget))
    # TODO(synk): if S is not a multiple of 128 on production shapes, zero-pad the
    # flattened spatial axis so stores stay unmasked (lane-dense) full-width vst.

    out = pl.pallas_call(
        functools.partial(_ca_fused_kernel, inv_s=inv_s),
        out_shape=out_shape,
        grid=(n // bn,),
        in_specs=[
            pl.BlockSpec((bn, c, s), lambda i: (i, 0, 0)),   # x, bn batch items
            pl.BlockSpec((c, csq), lambda i: (0, 0)),        # w1^T (resident, tiny)
            pl.BlockSpec((1, csq), lambda i: (0, 0)),        # b1
            pl.BlockSpec((c, csq), lambda i: (0, 0)),        # w2
            pl.BlockSpec((c, 1), lambda i: (0, 0)),          # b2
        ],
        out_specs=pl.BlockSpec((bn, c, s), lambda i: (i, 0, 0)),
        compiler_params=pltpu.CompilerParams(**params),
    )(x2, w1t, b1r, w2m, b2r)
    return out.reshape(n, c, d, h, w)


def _ref_channel_attention(x, w1, b1, w2, b2):
    # Pure-JAX reference of the PyTorch forward.
    m = jnp.mean(x.astype(jnp.float32), axis=(2, 3, 4))   # (N, C)
    y = m @ w1.reshape(w1.shape[0], -1).T + b1             # (N, Csq)  1x1x1 conv
    y = y * jax.nn.sigmoid(y)                               # SiLU
    y = y @ w2.reshape(w2.shape[0], -1).T + b2              # (N, C)    1x1x1 conv
    y = jax.nn.sigmoid(y)
    return x * y[:, :, None, None, None].astype(x.dtype)


if __name__ == "__main__":
    key = jax.random.PRNGKey(0)
    kx, kw1, kb1, kw2, kb2 = jax.random.split(key, 5)

    N, C, SQ = 2, 32, 16          # num_feat=32, squeeze_factor=16 -> hidden=2
    D = H = W = 8
    Csq = C // SQ

    x = jax.random.normal(kx, (N, C, D, H, W), jnp.float32)
    w1 = jax.random.normal(kw1, (Csq, C, 1, 1, 1), jnp.float32) / jnp.sqrt(C)
    b1 = 0.1 * jax.random.normal(kb1, (Csq,), jnp.float32)
    w2 = jax.random.normal(kw2, (C, Csq, 1, 1, 1), jnp.float32) / jnp.sqrt(Csq)
    b2 = 0.1 * jax.random.normal(kb2, (C,), jnp.float32)

    ref = _ref_channel_attention(x, w1, b1, w2, b2)

    # Fused single-pass path (what production shapes normally take).
    out = jax.block_until_ready(channel_attention_forward(x, w1, b1, w2, b2))
    assert out.shape == x.shape and out.dtype == x.dtype, (out.shape, out.dtype)
    err = float(jnp.max(jnp.abs(out - ref)))
    assert jnp.allclose(out, ref, atol=1e-5, rtol=1e-5), err

    # Exercise the two-phase spatially tiled fallback (normally used only when
    # the (C,S) block would not fit VMEM) by forcing a 128-wide spatial tile.
    out_t = jax.block_until_ready(
        channel_attention_forward(x, w1, b1, w2, b2, force_spatial_tile=128))
    err_t = float(jnp.max(jnp.abs(out_t - ref)))
    assert jnp.allclose(out_t, ref, atol=1e-5, rtol=1e-5), err_t

    print("KERNEL_OK")
</pallas_src>

<mosaic_0001>
module attributes {stable_mosaic.version = 11 : i64} {
  func.func @_ca_fused_kernel(%arg0: i32, %arg1: memref<1x32x512xf32, #tpu.memory_space<vmem>>, %arg2: memref<32x2xf32, #tpu.memory_space<vmem>>, %arg3: memref<1x2xf32, #tpu.memory_space<vmem>>, %arg4: memref<32x2xf32, #tpu.memory_space<vmem>>, %arg5: memref<32x1xf32, #tpu.memory_space<vmem>>, %arg6: memref<1x32x512xf32, #tpu.memory_space<vmem>>) attributes {dimension_semantics = [#tpu.dimension_semantics<parallel>], iteration_bounds = array<i64: 2>, scalar_prefetch = 0 : i64, scratch_operands = 0 : i64, tpu.core_type = #tpu.core_type<tc>, window_params = [{transform_indices = @transform_0, window_bounds = array<i64: 1, 32, 512>}, {pipeline_mode = #tpu.pipeline_mode<synchronous>, transform_indices = @transform_1, window_bounds = array<i64: 32, 2>}, {pipeline_mode = #tpu.pipeline_mode<synchronous>, transform_indices = @transform_2, window_bounds = array<i64: 1, 2>}, {pipeline_mode = #tpu.pipeline_mode<synchronous>, transform_indices = @transform_3, window_bounds = array<i64: 32, 2>}, {pipeline_mode = #tpu.pipeline_mode<synchronous>, transform_indices = @transform_4, window_bounds = array<i64: 32, 1>}, {transform_indices = @transform_5, window_bounds = array<i64: 1, 32, 512>}]} {
    %c0 = arith.constant 0 : index
    %c0_0 = arith.constant 0 : index
    %c0_1 = arith.constant 0 : index
    %0 = vector.load %arg1[%c0, %c0_0, %c0_1] : memref<1x32x512xf32, #tpu.memory_space<vmem>>, vector<1x32x512xf32>
    %cst = arith.constant dense<0.000000e+00> : vector<1x32xf32>
    %1 = vector.multi_reduction <add>, %0, %cst [2] : vector<1x32x512xf32> to vector<1x32xf32>
    %2 = vector.shape_cast %1 : vector<1x32xf32> to vector<1x32x1xf32>
    %cst_2 = arith.constant 0.001953125 : f32
    %3 = vector.broadcast %cst_2 : f32 to vector<1x32x1xf32>
    %4 = arith.mulf %2, %3 : vector<1x32x1xf32>
    %c0_3 = arith.constant 0 : index
    %c0_4 = arith.constant 0 : index
    %5 = vector.load %arg2[%c0_3, %c0_4] : memref<32x2xf32, #tpu.memory_space<vmem>>, vector<32x2xf32>
    %6 = vector.shape_cast %5 : vector<32x2xf32> to vector<1x32x2xf32>
    %7 = vector.broadcast %4 : vector<1x32x1xf32> to vector<1x32x2xf32>
    %8 = arith.mulf %6, %7 : vector<1x32x2xf32>
    %cst_5 = arith.constant dense<0.000000e+00> : vector<1x2xf32>
    %9 = vector.multi_reduction <add>, %8, %cst_5 [1] : vector<1x32x2xf32> to vector<1x2xf32>
    %10 = vector.shape_cast %9 : vector<1x2xf32> to vector<1x1x2xf32>
    %c0_6 = arith.constant 0 : index
    %c0_7 = arith.constant 0 : index
    %11 = vector.load %arg3[%c0_6, %c0_7] : memref<1x2xf32, #tpu.memory_space<vmem>>, vector<1x2xf32>
    %12 = vector.shape_cast %11 : vector<1x2xf32> to vector<1x1x2xf32>
    %13 = arith.addf %10, %12 : vector<1x1x2xf32>
    %14 = arith.negf %13 : vector<1x1x2xf32>
    %15 = math.exp %14 : vector<1x1x2xf32>
    %cst_8 = arith.constant 1.000000e+00 : f32
    %16 = vector.broadcast %cst_8 : f32 to vector<1x1x2xf32>
    %17 = arith.addf %16, %15 : vector<1x1x2xf32>
    %18 = arith.divf %16, %17 : vector<1x1x2xf32>
    %19 = arith.mulf %13, %18 : vector<1x1x2xf32>
    %c0_9 = arith.constant 0 : index
    %c0_10 = arith.constant 0 : index
    %20 = vector.load %arg4[%c0_9, %c0_10] : memref<32x2xf32, #tpu.memory_space<vmem>>, vector<32x2xf32>
    %21 = vector.shape_cast %20 : vector<32x2xf32> to vector<1x32x2xf32>
    %22 = vector.broadcast %19 : vector<1x1x2xf32> to vector<1x32x2xf32>
    %23 = arith.mulf %21, %22 : vector<1x32x2xf32>
    %cst_11 = arith.constant dense<0.000000e+00> : vector<1x32xf32>
    %24 = vector.multi_reduction <add>, %23, %cst_11 [2] : vector<1x32x2xf32> to vector<1x32xf32>
    %25 = vector.shape_cast %24 : vector<1x32xf32> to vector<1x32x1xf32>
    %c0_12 = arith.constant 0 : index
    %c0_13 = arith.constant 0 : index
    %26 = vector.load %arg5[%c0_12, %c0_13] : memref<32x1xf32, #tpu.memory_space<vmem>>, vector<32x1xf32>
    %27 = vector.shape_cast %26 : vector<32x1xf32> to vector<1x32x1xf32>
    %28 = arith.addf %25, %27 : vector<1x32x1xf32>
    %29 = arith.negf %28 : vector<1x32x1xf32>
    %30 = math.exp %29 : vector<1x32x1xf32>
    %cst_14 = arith.constant 1.000000e+00 : f32
    %31 = vector.broadcast %cst_14 : f32 to vector<1x32x1xf32>
    %32 = arith.addf %31, %30 : vector<1x32x1xf32>
    %33 = arith.divf %31, %32 : vector<1x32x1xf32>
    %c0_15 = arith.constant 0 : index
    %c0_16 = arith.constant 0 : index
    %c0_17 = arith.constant 0 : index
    %34 = vector.load %arg1[%c0_15, %c0_16, %c0_17] : memref<1x32x512xf32, #tpu.memory_space<vmem>>, vector<1x32x512xf32>
    %35 = vector.broadcast %33 : vector<1x32x1xf32> to vector<1x32x512xf32>
    %36 = arith.mulf %34, %35 : vector<1x32x512xf32>
    %c0_18 = arith.constant 0 : index
    %c0_19 = arith.constant 0 : index
    %c0_20 = arith.constant 0 : index
    %37 = vector.load %arg6[%c0_18, %c0_19, %c0_20] : memref<1x32x512xf32, #tpu.memory_space<vmem>>, vector<1x32x512xf32>
    tpu.vector_store %arg6[%c0_18, %c0_19, %c0_20], %36 {strides = array<i32>} : memref<1x32x512xf32, #tpu.memory_space<vmem>>, vector<1x32x512xf32>,
    return
  }
  func.func @transform_0(%arg0: i32) -> (i32, i32, i32) {
    %c0_i32 = arith.constant 0 : i32
    %c0_i32_0 = arith.constant 0 : i32
    %c0_i32_1 = arith.constant 0 : i32
    return %arg0, %c0_i32, %c0_i32_0 : i32, i32, i32
  }
  func.func @transform_1(%arg0: i32) -> (i32, i32) {
    %c0_i32 = arith.constant 0 : i32
    %c0_i32_0 = arith.constant 0 : i32
    %c0_i32_1 = arith.constant 0 : i32
    return %c0_i32, %c0_i32_0 : i32, i32
  }
  func.func @transform_2(%arg0: i32) -> (i32, i32) {
    %c0_i32 = arith.constant 0 : i32
    %c0_i32_0 = arith.constant 0 : i32
    %c0_i32_1 = arith.constant 0 : i32
    return %c0_i32, %c0_i32_0 : i32, i32
  }
  func.func @transform_3(%arg0: i32) -> (i32, i32) {
    %c0_i32 = arith.constant 0 : i32
    %c0_i32_0 = arith.constant 0 : i32
    %c0_i32_1 = arith.constant 0 : i32
    return %c0_i32, %c0_i32_0 : i32, i32
  }
  func.func @transform_4(%arg0: i32) -> (i32, i32) {
    %c0_i32 = arith.constant 0 : i32
    %c0_i32_0 = arith.constant 0 : i32
    %c0_i32_1 = arith.constant 0 : i32
    return %c0_i32, %c0_i32_0 : i32, i32
  }
  func.func @transform_5(%arg0: i32) -> (i32, i32, i32) {
    %c0_i32 = arith.constant 0 : i32
    %c0_i32_0 = arith.constant 0 : i32
    %c0_i32_1 = arith.constant 0 : i32
    return %arg0, %c0_i32, %c0_i32_0 : i32, i32, i32
  }
}

</mosaic_0001>

<llo_original>
// kernel: tpu_custom_call.1
$region0: #{tpu_custom_call.1}
  #allocation0 [shape = 'u32[]', space=smem, size = 0x4, offset = 0x4, fixed_abs, tag = 'smem constant byte address 0x4 - core index']
  #allocation1 [shape = 'u32[144,128]{1,0:T(1,128)}', space=vmem, size = 0x12000, scoped, tag = 'internal scratch']
  %s0 = inlined_call_operand.hbm [shape: f32[2,32,512], index: 0, kind: input, shape index: {}]
  %s1 = inlined_call_operand.vmem [shape: f32[32,2], index: 1, kind: input, shape index: {}]
  %s2 = inlined_call_operand.vmem [shape: f32[1,2], index: 2, kind: input, shape index: {}]
  %s3 = inlined_call_operand.vmem [shape: f32[32,2], index: 3, kind: input, shape index: {}]
  %s4 = inlined_call_operand.vmem [shape: f32[32,1], index: 4, kind: input, shape index: {}]
  %s5 = inlined_call_operand.hbm [shape: f32[2,32,512], index: 5, kind: output, shape index: {}]
  %s6 = sld [smem:[#allocation0]]
  $region57: #{tpu_custom_call.1} parent=0
    _
  %s8 = ssub.s32 1, %s6
  %s9 = scalar_select 0, %s8, %s6
  $region1: #{tpu_custom_call.1} parent=0
    #allocation2 [shape = 'u8[131072]{0}', space=vmem, size = 0x20000, scoped, tag = 'input window, operand 0']
    #allocation3 [shape = 's32[2]{0}', space=sflag, size = 0x8, scoped, tag = 'scoped memory for tpu_custom_call.1']
    #allocation4 [shape = 's32[2]{0}', space=sflag, size = 0x8, scoped, tag = 'scoped memory for tpu_custom_call.1']
    #allocation5 [shape = 'u8[131072]{0}', space=vmem, size = 0x20000, scoped, tag = 'output window, operand 0']
    %10 = vsyncpa [#allocation3], 0
    %s11 = scalar_lea.sflag [#allocation3], 1
    %12 = vsyncpa %s11, 0
    %13 = vsyncpa [#allocation4], 0
    %s14 = scalar_lea.sflag [#allocation4], 1
    %15 = vsyncpa %s14, 0
    loop: start=0, step=1, limit=4
    $region2: #{tpu_custom_call.1} parent=1 // loop_pre_header
      _
    $region3: #{tpu_custom_call.1} parent=1 // loop_header
      %s17 = sphi 0, %s21
      %p18 = scmp.ge.s32.totalorder %s17, 4
      %s27 = sphi 0, %s29
      %s30 = sphi 0, %s27
      %s31 = sphi 0, %s30
      %s47 = sphi 0, %s31
      %s51 = sphi 0, %s51
      %s53 = sphi 0, %s51
      %s54 = sphi 0, %s53
      %s68 = sphi 0, %s54
      %s72 = sphi 0, %s72
      %s74 = sphi 0, %s72
      %s75 = sphi 0, %s74
      %s89 = sphi 0, %s75
      %s93 = sphi 0, %s93
      %s95 = sphi 0, %s93
      %s96 = sphi 0, %s95
      %s110 = sphi 0, %s96
      %s114 = sphi 0, %s114
      %s116 = sphi 0, %s114
      %s117 = sphi 0, %s116
      %s131 = sphi 0, %s117
      %s137 = sphi 0, %s139
      %s140 = sphi 0, %s137
      %s141 = sphi 0, %s140
      %s157 = sphi 0, %s141
    $region4: #{tpu_custom_call.1} parent=1 // loop_header_branch
      %20 = sbr.rel (%p18) target = $region8
    $region5: #{tpu_custom_call.1} parent=1 // loop_body
      %s22 = ssub.s32 %s17, 1
      %s23 = ssub.s32 %s17, 2
      %s24 = sadd.s32 %s17, 1
      %s25 = ssub.s32 %s17, %s24
      %p26 = scmp.eq.s32.totalorder %s25, 0
      %s28 = sadd.s32 %s27, 1
      %s29 = scalar_select %p26, %s27, %s28
      %p32 = pneg %p26
      %p33 = scmp.eq.s32.totalorder %s17, 1
      %p34 = por %p32, %p33
      %p35 = scmp.ne.s32.totalorder %s27, %s30
      %p36 = scmp.eq.s32.totalorder %s17, 0
      %p37 = por %p35, %p36
      %p38 = scmp.ne.s32.totalorder %s27, %s30
      %p39 = scmp.eq.s32.totalorder %s22, 1
      %p40 = por %p38, %p39
      %p41 = scmp.ne.s32.totalorder %s30, %s31
      %p42 = scmp.eq.s32.totalorder %s22, 0
      %p43 = por %p41, %p42
      %p44 = scmp.ne.s32.totalorder %s30, %s31
      %p45 = scmp.eq.s32.totalorder %s23, 1
      %p46 = por %p44, %p45
      %p48 = scmp.ne.s32.totalorder %s31, %s47
      %p49 = scmp.eq.s32.totalorder %s23, 0
      %p50 = por %p48, %p49
      %s52 = sadd.s32 %s51, 1
      %p55 = scmp.eq.s32.totalorder %s17, 1
      %p56 = scmp.ne.s32.totalorder %s51, %s53
      %p57 = scmp.eq.s32.totalorder %s17, 0
      %p58 = por %p56, %p57
      %p59 = scmp.ne.s32.totalorder %s51, %s53
      %p60 = scmp.eq.s32.totalorder %s22, 1
      %p61 = por %p59, %p60
      %p62 = scmp.ne.s32.totalorder %s53, %s54
      %p63 = scmp.eq.s32.totalorder %s22, 0
      %p64 = por %p62, %p63
      %p65 = scmp.ne.s32.totalorder %s53, %s54
      %p66 = scmp.eq.s32.totalorder %s23, 1
      %p67 = por %p65, %p66
      %p69 = scmp.ne.s32.totalorder %s54, %s68
      %p70 = scmp.eq.s32.totalorder %s23, 0
      %p71 = por %p69, %p70
      %s73 = sadd.s32 %s72, 1
      %p76 = scmp.eq.s32.totalorder %s17, 1
      %p77 = scmp.ne.s32.totalorder %s72, %s74
      %p78 = scmp.eq.s32.totalorder %s17, 0
      %p79 = por %p77, %p78
      %p80 = scmp.ne.s32.totalorder %s72, %s74
      %p81 = scmp.eq.s32.totalorder %s22, 1
      %p82 = por %p80, %p81
      %p83 = scmp.ne.s32.totalorder %s74, %s75
      %p84 = scmp.eq.s32.totalorder %s22, 0
      %p85 = por %p83, %p84
      %p86 = scmp.ne.s32.totalorder %s74, %s75
      %p87 = scmp.eq.s32.totalorder %s23, 1
      %p88 = por %p86, %p87
      %p90 = scmp.ne.s32.totalorder %s75, %s89
      %p91 = scmp.eq.s32.totalorder %s23, 0
      %p92 = por %p90, %p91
      %s94 = sadd.s32 %s93, 1
      %p97 = scmp.eq.s32.totalorder %s17, 1
      %p98 = scmp.ne.s32.totalorder %s93, %s95
      %p99 = scmp.eq.s32.totalorder %s17, 0
      %p100 = por %p98, %p99
      %p101 = scmp.ne.s32.totalorder %s93, %s95
      %p102 = scmp.eq.s32.totalorder %s22, 1
      %p103 = por %p101, %p102
      %p104 = scmp.ne.s32.totalorder %s95, %s96
      %p105 = scmp.eq.s32.totalorder %s22, 0
      %p106 = por %p104, %p105
      %p107 = scmp.ne.s32.totalorder %s95, %s96
      %p108 = scmp.eq.s32.totalorder %s23, 1
      %p109 = por %p107, %p108
      %p111 = scmp.ne.s32.totalorder %s96, %s110
      %p112 = scmp.eq.s32.totalorder %s23, 0
      %p113 = por %p111, %p112
      %s115 = sadd.s32 %s114, 1
      %p118 = scmp.eq.s32.totalorder %s17, 1
      %p119 = scmp.ne.s32.totalorder %s114, %s116
      %p120 = scmp.eq.s32.totalorder %s17, 0
      %p121 = por %p119, %p120
      %p122 = scmp.ne.s32.totalorder %s114, %s116
      %p123 = scmp.eq.s32.totalorder %s22, 1
      %p124 = por %p122, %p123
      %p125 = scmp.ne.s32.totalorder %s116, %s117
      %p126 = scmp.eq.s32.totalorder %s22, 0
      %p127 = por %p125, %p126
      %p128 = scmp.ne.s32.totalorder %s116, %s117
      %p129 = scmp.eq.s32.totalorder %s23, 1
      %p130 = por %p128, %p129
      %p132 = scmp.ne.s32.totalorder %s117, %s131
      %p133 = scmp.eq.s32.totalorder %s23, 0
      %p134 = por %p132, %p133
      %s135 = ssub.s32 %s17, %s24
      %p136 = scmp.eq.s32.totalorder %s135, 0
      %s138 = sadd.s32 %s137, 1
      %s139 = scalar_select %p136, %s137, %s138
      %p142 = pneg %p136
      %p143 = scmp.eq.s32.totalorder %s17, 1
      %p144 = por %p142, %p143
      %p145 = scmp.ne.s32.totalorder %s137, %s140
      %p146 = scmp.eq.s32.totalorder %s17, 0
      %p147 = por %p145, %p146
      %p148 = scmp.ne.s32.totalorder %s137, %s140
      %p149 = scmp.eq.s32.totalorder %s22, 1
      %p150 = por %p148, %p149
      %p151 = scmp.ne.s32.totalorder %s140, %s141
      %p152 = scmp.eq.s32.totalorder %s22, 0
      %p153 = por %p151, %p152
      %p154 = scmp.ne.s32.totalorder %s140, %s141
      %p155 = scmp.eq.s32.totalorder %s23, 1
      %p156 = por %p154, %p155
      %p158 = scmp.ne.s32.totalorder %s141, %s157
      %p159 = scmp.eq.s32.totalorder %s23, 0
      %p160 = por %p158, %p159
      %p161 = scmp.le.s32.totalorder 1, %s17
      %p162 = scmp.lt.s32.totalorder %s17, 3
      %p163 = pnand %p161, %p162
      %p164 = pneg %p163
      // Predicated region
      $region9: #{tpu_custom_call.1} parent=5 // pred_check
        _
      $region10: #{tpu_custom_call.1} parent=5 // pred_check_branch
        %166 = sbr.rel (%p163) target = $region12
      $region11: #{tpu_custom_call.1} parent=5 // pred_region
        %s167 = ssub.s32 %s17, 1
        // Predicated region
        $region13: #{tpu_custom_call.1} parent=11 // pred_check
          %p168 = pneg %p64
        $region14: #{tpu_custom_call.1} parent=11 // pred_check_branch
          %170 = sbr.rel (%p168) target = $region16
        $region15: #{tpu_custom_call.1} parent=11 // pred_region
          _
        $region16: #{tpu_custom_call.1} parent=11 // pred_fallthru
          _
        // Predicated region
        $region17: #{tpu_custom_call.1} parent=11 // pred_check
          %p171 = pneg %p85
        $region18: #{tpu_custom_call.1} parent=11 // pred_check_branch
          %173 = sbr.rel (%p171) target = $region20
        $region19: #{tpu_custom_call.1} parent=11 // pred_region
          _
        $region20: #{tpu_custom_call.1} parent=11 // pred_fallthru
          _
        // Predicated region
        $region21: #{tpu_custom_call.1} parent=11 // pred_check
          %p174 = pneg %p106
        $region22: #{tpu_custom_call.1} parent=11 // pred_check_branch
          %176 = sbr.rel (%p174) target = $region24
        $region23: #{tpu_custom_call.1} parent=11 // pred_region
          _
        $region24: #{tpu_custom_call.1} parent=11 // pred_fallthru
          _
        // Predicated region
        $region25: #{tpu_custom_call.1} parent=11 // pred_check
          %p177 = pneg %p127
        $region26: #{tpu_custom_call.1} parent=11 // pred_check_branch
          %179 = sbr.rel (%p177) target = $region28
        $region27: #{tpu_custom_call.1} parent=11 // pred_region
          _
        $region28: #{tpu_custom_call.1} parent=11 // pred_fallthru
          _
      $region12: #{tpu_custom_call.1} parent=5 // pred_fallthru
        _
      %p180 = scmp.lt.s32.totalorder %s17, 2
      // Predicated region
      $region29: #{tpu_custom_call.1} parent=5 // pred_check
        %p181 = pneg %p180
      $region30: #{tpu_custom_call.1} parent=5 // pred_check_branch
        %183 = sbr.rel (%p181) target = $region32
      $region31: #{tpu_custom_call.1} parent=5 // pred_region
        // Predicated region
        $region33: #{tpu_custom_call.1} parent=31 // pred_check
          %p184 = pneg %p37
        $region34: #{tpu_custom_call.1} parent=31 // pred_check_branch
          %186 = sbr.rel (%p184) target = $region36
        $region35: #{tpu_custom_call.1} parent=31 // pred_region
          %s187 = sand.u32 %s27, 1
          %s188 = scalar_lea.sflag [#allocation3], %s187
          %s189 = sand.u32 %s27, 1
          %s190 = smul.addr %s189, 128
          %s191 = scalar_lea.vmem [#allocation2], %s190
          %s193 = ssub.s32 2048, 2048
          %194 = vsyncadd %s188, %s193
          %s195 = smul.addr %s17, 16
          %s196 = smul.addr %s195, 128
          %s197 = scalar_lea.hbm %s0, %s196
          %s198 = sshll.u32 %s191, 4
          %s199 = int_to_ptr.vmem [resolvable:$true] %s198
          %204 = dma.hbm_to_vmem [thread:$0]  %s197, 2048, %s199, %s188, 512, 512, 32
        $region36: #{tpu_custom_call.1} parent=31 // pred_fallthru
          _
      $region32: #{tpu_custom_call.1} parent=5 // pred_fallthru
        _
      %p205 = scmp.le.s32.totalorder 1, %s17
      %p206 = scmp.lt.s32.totalorder %s17, 3
      %p207 = pnand %p205, %p206
      %p208 = pneg %p207
      // Predicated region
      $region37: #{tpu_custom_call.1} parent=5 // pred_check
        _
      $region38: #{tpu_custom_call.1} parent=5 // pred_check_branch
        %210 = sbr.rel (%p207) target = $region40
      $region39: #{tpu_custom_call.1} parent=5 // pred_region
        %s211 = ssub.s32 %s17, 1
        %s212 = sand.u32 %s30, 1
        %s213 = scalar_lea.sflag [#allocation3], %s212
        %s214 = sand.u32 %s30, 1
        %s215 = smul.addr %s214, 128
        %s216 = scalar_lea.vmem [#allocation2], %s215
        // Predicated region
        $region41: #{tpu_custom_call.1} parent=39 // pred_check
          %p217 = pneg %p43
        $region42: #{tpu_custom_call.1} parent=39 // pred_check_branch
          %219 = sbr.rel (%p217) target = $region44
        $region43: #{tpu_custom_call.1} parent=39 // pred_region
          %220 = dma.done %s213, 2048
        $region44: #{tpu_custom_call.1} parent=39 // pred_fallthru
          _
        %s221 = sand.u32 %s30, 1
        %s222 = scalar_lea.sflag [#allocation3], %s221
        %s223 = sand.u32 %s30, 1
        %s224 = smul.addr %s223, 128
        %s225 = scalar_lea.vmem [#allocation2], %s224
        %p226 = pneg %p43
        %p227 = pneg %p40
        %p228 = pneg %p64
        %p229 = pneg %p61
        %p230 = pneg %p85
        %p231 = pneg %p82
        %p232 = pneg %p106
        %p233 = pneg %p103
        %p234 = pneg %p127
        %p235 = pneg %p124
        %p236 = pneg %p153
        %p237 = pneg %p150
        %s238 = sand.u32 %s140, 1
        %s239 = scalar_lea.sflag [#allocation4], %s238
        %s240 = sand.u32 %s140, 1
        %s241 = smul.addr %s240, 128
        %s242 = scalar_lea.vmem [#allocation5], %s241
        %v243 = vld [vmem:[%s216] sm:$0xff]
        %v244 = vld [vmem:[%s216 + $0x8] sm:$0xff]
        %v245 = vld [vmem:[%s216 + $0x10] sm:$0xff]
        %v246 = vld [vmem:[%s216 + $0x18] sm:$0xff]
        %v247 = vld [vmem:[%s216 + $0x20] sm:$0xff]
        %v248 = vld [vmem:[%s216 + $0x28] sm:$0xff]
        %v249 = vld [vmem:[%s216 + $0x30] sm:$0xff]
        %v250 = vld [vmem:[%s216 + $0x38] sm:$0xff]
        %v251 = vld [vmem:[%s216 + $0x40] sm:$0xff]
        %v252 = vld [vmem:[%s216 + $0x48] sm:$0xff]
        %v253 = vld [vmem:[%s216 + $0x50] sm:$0xff]
        %v254 = vld [vmem:[%s216 + $0x58] sm:$0xff]
        %v255 = vld [vmem:[%s216 + $0x60] sm:$0xff]
        %v256 = vld [vmem:[%s216 + $0x68] sm:$0xff]
        %v257 = vld [vmem:[%s216 + $0x70] sm:$0xff]
        %v258 = vld [vmem:[%s216 + $0x78] sm:$0xff]
        %v259 = vadd.f32 %v243, %v244
        %v260 = vadd.f32 %v259, %v245
        %v261 = vadd.f32 %v260, %v246
        %262 = vadd.xlane.f32.xlu0 %v261
        %v263 = vpop.xlane.xlu0 %262
        %v264 = vadd.f32 %v247, %v248
        %v265 = vadd.f32 %v264, %v249
        %v266 = vadd.f32 %v265, %v250
        %267 = vadd.xlane.f32.xlu0 %v266
        %v268 = vpop.xlane.xlu0 %267
        %v269 = vadd.f32 %v251, %v252
        %v270 = vadd.f32 %v269, %v253
        %v271 = vadd.f32 %v270, %v254
        %272 = vadd.xlane.f32.xlu0 %v271
        %v273 = vpop.xlane.xlu0 %272
        %v274 = vadd.f32 %v255, %v256
        %v275 = vadd.f32 %v274, %v257
        %v276 = vadd.f32 %v275, %v258
        %277 = vadd.xlane.f32.xlu0 %v276
        %v278 = vpop.xlane.xlu0 %277
        %v279 = vmul.f32 %v263, 0.001953125
        %v280 = vmul.f32 %v268, 0.001953125
        %v281 = vmul.f32 %v273, 0.001953125
        %v282 = vmul.f32 %v278, 0.001953125
        %v283 = vld [vmem:[%s1] sm:$0xff]
        %v284 = vld [vmem:[%s1 + $0x8] sm:$0xff]
        %v285 = vld [vmem:[%s1 + $0x10] sm:$0xff]
        %v286 = vld [vmem:[%s1 + $0x18] sm:$0xff]
        %v287 = vmul.f32 %v283, %v279
        %v288 = vmul.f32 %v284, %v280
        %v289 = vmul.f32 %v285, %v281
        %v290 = vmul.f32 %v286, %v282
        %vm291 = vcmask 15360
        %v292 = vsel %vm291, %v287, 0.0
        %v293 = vsel %vm291, %v288, 0.0
        %v294 = vadd.f32 %v292, %v293
        %v295 = vsel %vm291, %v289, 0.0
        %v296 = vadd.f32 %v294, %v295
        %v297 = vsel %vm291, %v290, 0.0
        %v298 = vadd.f32 %v296, %v297
        %v299 = vrot.slane %v298, 4
        %v300 = vadd.f32 %v298, %v299
        %v301 = vrot.slane %v300, 2
        %v302 = vadd.f32 %v300, %v301
        %v303 = vrot.slane %v302, 1
        %v304 = vadd.f32 %v302, %v303
        %v305 = vld [vmem:[%s2] sm:$0x1]
        %v306 = vadd.f32 %v304, %v305
        %v307 = vxor.u32 %v306, 2147483648
        %v308 = vmul.f32 %v307, 1.442695
        %v309 = vpow.pop %v308
        %v310 = vadd.f32 %v309, 1.0
        %v311 = vrcp.pop %v310
        %v312 = vmul.f32 1.0, %v311
        %v313 = vmul.f32 %v306, %v312
        %v314 = vld [vmem:[%s3] sm:$0xff]
        %v315 = vld [vmem:[%s3 + $0x8] sm:$0xff]
        %v316 = vld [vmem:[%s3 + $0x10] sm:$0xff]
        %v317 = vld [vmem:[%s3 + $0x18] sm:$0xff]
        %v318 = vlaneseq
        %v319 = vshrl.u32 %v318, 7
        %v320 = vsub.s32 0, %v319
        %v321 = vrot.slane %v313, %v320
        %v322 = vmul.f32 %v314, %v321
        %v323 = vmul.f32 %v315, %v321
        %v324 = vmul.f32 %v316, %v321
        %v325 = vmul.f32 %v317, %v321
        %v326 = vsel %vm291, %v322, 0.0
        %327 = vadd.xlane.f32.xlu0 %v326
        %v328 = vpop.xlane.xlu0 %327
        %v329 = vsel %vm291, %v323, 0.0
        %330 = vadd.xlane.f32.xlu0 %v329
        %v331 = vpop.xlane.xlu0 %330
        %v332 = vsel %vm291, %v324, 0.0
        %333 = vadd.xlane.f32.xlu0 %v332
        %v334 = vpop.xlane.xlu0 %333
        %v335 = vsel %vm291, %v325, 0.0
        %336 = vadd.xlane.f32.xlu0 %v335
        %v337 = vpop.xlane.xlu0 %336
        %v338 = vld [vmem:[%s4] sm:$0xff]
        %v339 = vld [vmem:[%s4 + $0x8] sm:$0xff]
        %v340 = vld [vmem:[%s4 + $0x10] sm:$0xff]
        %v341 = vld [vmem:[%s4 + $0x18] sm:$0xff]
        %v342 = vadd.f32 %v328, %v338
        %v343 = vadd.f32 %v331, %v339
        %v344 = vadd.f32 %v334, %v340
        %v345 = vadd.f32 %v337, %v341
        %v346 = vxor.u32 %v342, 2147483648
        %v347 = vxor.u32 %v343, 2147483648
        %v348 = vxor.u32 %v344, 2147483648
        %v349 = vxor.u32 %v345, 2147483648
        %v350 = vmul.f32 %v346, 1.442695
        %v351 = vpow.pop %v350
        %v352 = vmul.f32 %v347, 1.442695
        %v353 = vpow.pop %v352
        %v354 = vmul.f32 %v348, 1.442695
        %v355 = vpow.pop %v354
        %v356 = vmul.f32 %v349, 1.442695
        %v357 = vpow.pop %v356
        %v358 = vadd.f32 %v351, 1.0
        %v359 = vadd.f32 %v353, 1.0
        %v360 = vadd.f32 %v355, 1.0
        %v361 = vadd.f32 %v357, 1.0
        %v362 = vrcp.pop %v358
        %v363 = vmul.f32 1.0, %v362
        %v364 = vrcp.pop %v359
        %v365 = vmul.f32 1.0, %v364
        %v366 = vrcp.pop %v360
        %v367 = vmul.f32 1.0, %v366
        %v368 = vrcp.pop %v361
        %v369 = vmul.f32 1.0, %v368
        %371 = vset.pattern.permute.xlu0 0
        %372 = vperm.xlu0 %371, %v363
        %v373 = vpop.permute.xlu0 %372
        %376 = vset.pattern.permute.xlu0 0
        %377 = vperm.xlu0 %376, %v365
        %v378 = vpop.permute.xlu0 %377
        %381 = vset.pattern.permute.xlu0 0
        %382 = vperm.xlu0 %381, %v367
        %v383 = vpop.permute.xlu0 %382
        %386 = vset.pattern.permute.xlu0 0
        %387 = vperm.xlu0 %386, %v369
        %v388 = vpop.permute.xlu0 %387
        %v390 = vmul.f32 %v243, %v373
        %v391 = vmul.f32 %v244, %v373
        %v392 = vmul.f32 %v245, %v373
        %v393 = vmul.f32 %v246, %v373
        %v394 = vmul.f32 %v247, %v378
        %v395 = vmul.f32 %v248, %v378
        %v396 = vmul.f32 %v249, %v378
        %v397 = vmul.f32 %v250, %v378
        %v398 = vmul.f32 %v251, %v383
        %v399 = vmul.f32 %v252, %v383
        %v400 = vmul.f32 %v253, %v383
        %v401 = vmul.f32 %v254, %v383
        %v402 = vmul.f32 %v255, %v388
        %v403 = vmul.f32 %v256, %v388
        %v404 = vmul.f32 %v257, %v388
        %v405 = vmul.f32 %v258, %v388
        %406 = vst [vmem:[%s242] sm:$0xff] %v390
        %407 = vst [vmem:[%s242 + $0x8] sm:$0xff] %v391
        %408 = vst [vmem:[%s242 + $0x10] sm:$0xff] %v392
        %409 = vst [vmem:[%s242 + $0x18] sm:$0xff] %v393
        %410 = vst [vmem:[%s242 + $0x20] sm:$0xff] %v394
        %411 = vst [vmem:[%s242 + $0x28] sm:$0xff] %v395
        %412 = vst [vmem:[%s242 + $0x30] sm:$0xff] %v396
        %413 = vst [vmem:[%s242 + $0x38] sm:$0xff] %v397
        %414 = vst [vmem:[%s242 + $0x40] sm:$0xff] %v398
        %415 = vst [vmem:[%s242 + $0x48] sm:$0xff] %v399
        %416 = vst [vmem:[%s242 + $0x50] sm:$0xff] %v400
        %417 = vst [vmem:[%s242 + $0x58] sm:$0xff] %v401
        %418 = vst [vmem:[%s242 + $0x60] sm:$0xff] %v402
        %419 = vst [vmem:[%s242 + $0x68] sm:$0xff] %v403
        %420 = vst [vmem:[%s242 + $0x70] sm:$0xff] %v404
        %421 = vst [vmem:[%s242 + $0x78] sm:$0xff] %v405
        %s422 = sand.u32 %s140, 1
        %s423 = scalar_lea.sflag [#allocation4], %s422
        %s424 = sand.u32 %s140, 1
        %s425 = smul.addr %s424, 128
        %s426 = scalar_lea.vmem [#allocation5], %s425
        // Predicated region
        $region45: #{tpu_custom_call.1} parent=39 // pred_check
          %p427 = pneg %p150
        $region46: #{tpu_custom_call.1} parent=39 // pred_check_branch
          %429 = sbr.rel (%p427) target = $region48
        $region47: #{tpu_custom_call.1} parent=39 // pred_region
          %s431 = ssub.s32 2048, 2048
          %432 = vsyncadd %s423, %s431
          %s433 = smul.addr %s22, 16
          %s434 = smul.addr %s433, 128
          %s435 = scalar_lea.hbm %s5, %s434
          %s436 = sshll.u32 %s426, 4
          %s437 = int_to_ptr.vmem [resolvable:$true] %s436
          %442 = dma.vmem_to_hbm [thread:$0]  %s437, 2048, %s435, %s423, 512, 512, 32
        $region48: #{tpu_custom_call.1} parent=39 // pred_fallthru
          _
      $region40: #{tpu_custom_call.1} parent=5 // pred_fallthru
        _
      %p443 = scmp.le.s32.totalorder 2, %s17
      // Predicated region
      $region49: #{tpu_custom_call.1} parent=5 // pred_check
        %p444 = pneg %p443
      $region50: #{tpu_custom_call.1} parent=5 // pred_check_branch
        %446 = sbr.rel (%p444) target = $region52
      $region51: #{tpu_custom_call.1} parent=5 // pred_region
        %s447 = ssub.s32 %s17, 2
        // Predicated region
        $region53: #{tpu_custom_call.1} parent=51 // pred_check
          %p448 = pneg %p156
        $region54: #{tpu_custom_call.1} parent=51 // pred_check_branch
          %450 = sbr.rel (%p448) target = $region56
        $region55: #{tpu_custom_call.1} parent=51 // pred_region
          %s451 = sand.u32 %s141, 1
          %s452 = scalar_lea.sflag [#allocation4], %s451
          %s453 = sand.u32 %s141, 1
          %s454 = smul.addr %s453, 128
          %s455 = scalar_lea.vmem [#allocation5], %s454
          %456 = dma.done %s452, 2048
        $region56: #{tpu_custom_call.1} parent=51 // pred_fallthru
          _
      $region52: #{tpu_custom_call.1} parent=5 // pred_fallthru
        _
    $region6: #{tpu_custom_call.1} parent=1 // loop_footer
      %s21 = sadd.s32 1, %s17
    $region7: #{tpu_custom_call.1} parent=1 // loop_footer_branch
      %16 = sbr.rel target = $region3
    $region8: #{tpu_custom_call.1} parent=1 // loop_exit
      _
    %457 = vsyncpa [#allocation3], 1
    %s458 = scalar_lea.sflag [#allocation3], 1
    %459 = vsyncpa %s458, 1
    %460 = vsyncpa [#allocation4], 1
    %s461 = scalar_lea.sflag [#allocation4], 1
    %462 = vsyncpa %s461, 1

</llo_original>
